<compile_context>
chip_gen: v5e
topology: v5e:2x2
jax: 0.10.0
libtpu: 0.0.40
codegen_flags: <defaults>
</compile_context>

<pallas_src>
import functools

import jax
import jax.numpy as jnp
from jax import lax
from jax.experimental import pallas as pl
from jax.experimental.pallas import tpu as pltpu

_MAX_TB = 32768   # VMEM cap: x tile costs 512 B/row in VMEM (lane-padded), x2 buffers
_CHUNK = 512      # compute sub-chunk (batch rows -> lanes); intermediates stay in vregs


def _round_up(n, m):
    return ((n + m - 1) // m) * m


def mlp_kernel(x_ref, w1_ref, b1_ref, w2_ref, b2_ref, w3_ref, b3_ref, o_ref):
    # x_ref: (TB, D) batch-major input tile (streamed per grid step).
    # o_ref: (TB//C, C) lane-dense output tile; row r holds batch rows [r*C, r*C+C).
    # Weights (PyTorch (out,in) layout, VMEM-resident): w1 (64,D), w2 (32,64),
    # w3 (32,1) column; biases stored as columns.
    n_chunks, chunk = o_ref.shape

    w1 = w1_ref[...]
    b1 = b1_ref[...]
    w2 = w2_ref[...]
    b2 = b2_ref[...]
    w3 = w3_ref[...]
    b3 = b3_ref[...]

    def body(c, carry):
        off = pl.multiple_of(c * chunk, chunk)
        xc = x_ref[pl.ds(off, chunk), :].astype(jnp.float32)          # (C, D)
        # Layer 1, transposed orientation: (64, D) . (C, D)^T -> (64, C).
        h1 = lax.dot_general(w1, xc, (((1,), (1,)), ((), ())),
                             preferred_element_type=jnp.float32) + b1
        h1 = jnp.where(h1 > 0, h1, 0.2 * h1)
        # Layer 2: (32, 64) @ (64, C) -> (32, C).
        h2 = jnp.dot(w2, h1, preferred_element_type=jnp.float32) + b2
        h2 = jnp.where(h2 > 0, h2, 0.2 * h2)
        # Layer 3 (32 -> 1) on VPU + sublane reduce -> (1, C), lane-dense.
        out = jnp.sum(h2 * w3, axis=0, keepdims=True) + b3
        o_ref[pl.ds(c, 1), :] = out.astype(o_ref.dtype)
        return carry

    lax.fori_loop(0, n_chunks, body, 0)


@functools.partial(jax.jit, static_argnames=("block_batch",))
def probability_discriminator(x, params, *, block_batch=16384):
    """x: (B, input_dim). params: PyTorch-layout weights, column biases, w3 as (32,1)."""
    B, D = x.shape
    H1 = params["w1"].shape[0]
    H2 = params["w2"].shape[0]

    B8 = _round_up(B, 8)
    # Batch tile: big enough to amortize per-step pipeline overhead, small enough
    # for VMEM, and clamped so the grid has >=2 steps when possible (v7x megacore).
    tb = min(B8, _round_up(block_batch, 8), _MAX_TB, _round_up(pl.cdiv(B8, 2), 8))
    C = min(_CHUNK, tb)
    TB = max(C, (tb // C) * C)
    n_chunks = TB // C

    Bp = _round_up(B, TB)
    if Bp != B:
        # TODO(synk): mask the tail tile instead of an extra pad copy over x.
        x = jnp.pad(x, ((0, Bp - B), (0, 0)))
    grid = (Bp // TB,)

    const = lambda i: (0, 0)  # weights/biases: same block every step (stay resident)

    x_bytes = Bp * D * jnp.dtype(x.dtype).itemsize
    w_bytes = sum(int(v.size) * jnp.dtype(v.dtype).itemsize for v in params.values())
    cost = pl.CostEstimate(
        flops=2 * Bp * (D * H1 + H1 * H2 + H2),
        transcendentals=0,
        bytes_accessed=x_bytes + Bp * 4 + w_bytes,
    )

    out = pl.pallas_call(
        mlp_kernel,
        out_shape=jax.ShapeDtypeStruct((Bp // TB, n_chunks, C), jnp.float32),
        grid_spec=pltpu.PrefetchScalarGridSpec(
            num_scalar_prefetch=0,
            grid=grid,
            in_specs=[
                pl.BlockSpec((TB, D), lambda i: (i, 0)),   # x: streamed per tile
                pl.BlockSpec((H1, D), const),              # w1 (64, 10)
                pl.BlockSpec((H1, 1), const),              # b1 (64, 1)
                pl.BlockSpec((H2, H1), const),             # w2 (32, 64)
                pl.BlockSpec((H2, 1), const),              # b2 (32, 1)
                pl.BlockSpec((H2, 1), const),              # w3 (32, 1) column
                pl.BlockSpec((1, 1), const),               # b3 (1, 1)
            ],
            out_specs=pl.BlockSpec((None, n_chunks, C), lambda i: (i, 0, 0)),
        ),
        compiler_params=pltpu.CompilerParams(
            dimension_semantics=("parallel",),
            vmem_limit_bytes=48 * 1024 * 1024,
        ),
        cost_estimate=cost,
    )(
        x,
        params["w1"], params["b1"],
        params["w2"], params["b2"],
        params["w3"], params["b3"],
    )
    return out.reshape(Bp, 1)[:B]


def init_params(key, input_dim=10):
    """PyTorch-style uniform fan-in init; weights kept in PyTorch (out, in) layout."""
    ks = jax.random.split(key, 6)

    def lin(kw, kb, fan_in, fan_out):
        bound = 1.0 / jnp.sqrt(fan_in)
        w = jax.random.uniform(kw, (fan_out, fan_in), jnp.float32, -bound, bound)
        b = jax.random.uniform(kb, (fan_out, 1), jnp.float32, -bound, bound)
        return w, b

    w1, b1 = lin(ks[0], ks[1], input_dim, 64)
    w2, b2 = lin(ks[2], ks[3], 64, 32)
    w3, b3 = lin(ks[4], ks[5], 32, 1)
    # Last layer weight stored as a (32, 1) column for the VPU-reduce path.
    return {"w1": w1, "b1": b1, "w2": w2, "b2": b2, "w3": w3.T, "b3": b3}


def reference(x, p):
    h1 = x @ p["w1"].T + p["b1"].T
    h1 = jnp.where(h1 > 0, h1, 0.2 * h1)
    h2 = h1 @ p["w2"].T + p["b2"].T
    h2 = jnp.where(h2 > 0, h2, 0.2 * h2)
    return h2 @ p["w3"] + p["b3"].T


if __name__ == "__main__":
    key = jax.random.PRNGKey(0)
    k_param, k_x1, k_x2 = jax.random.split(key, 3)

    input_dim = 10
    params = init_params(k_param, input_dim)

    # Small batch (single grid step, single inner chunk).
    x_small = jax.random.normal(k_x1, (8, input_dim), jnp.float32)
    out_small = jax.block_until_ready(probability_discriminator(x_small, params))
    ref_small = reference(x_small, params)
    assert out_small.shape == (8, 1), out_small.shape
    assert jnp.allclose(out_small, ref_small, atol=1e-3, rtol=1e-3)

    # Batch that is not a multiple of the tile (exercises grid + tail padding).
    x_big = jax.random.normal(k_x2, (300, input_dim), jnp.float32)
    out_big = jax.block_until_ready(
        probability_discriminator(x_big, params, block_batch=128)
    )
    ref_big = reference(x_big, params)
    assert out_big.shape == (300, 1), out_big.shape
    assert jnp.allclose(out_big, ref_big, atol=1e-3, rtol=1e-3)

    print("KERNEL_OK")
</pallas_src>

<mosaic_0001>
module attributes {stable_mosaic.version = 11 : i64} {
  func.func @mlp_kernel(%arg0: i32, %arg1: memref<8x10xf32, #tpu.memory_space<vmem>>, %arg2: memref<64x10xf32, #tpu.memory_space<vmem>>, %arg3: memref<64x1xf32, #tpu.memory_space<vmem>>, %arg4: memref<32x64xf32, #tpu.memory_space<vmem>>, %arg5: memref<32x1xf32, #tpu.memory_space<vmem>>, %arg6: memref<32x1xf32, #tpu.memory_space<vmem>>, %arg7: memref<1x1xf32, #tpu.memory_space<vmem>>, %arg8: memref<1x1x8xf32, #tpu.memory_space<vmem>>) attributes {dimension_semantics = [#tpu.dimension_semantics<parallel>], iteration_bounds = array<i64: 1>, scalar_prefetch = 0 : i64, scratch_operands = 0 : i64, tpu.core_type = #tpu.core_type<tc>, window_params = [{transform_indices = @transform_0, window_bounds = array<i64: 8, 10>}, {pipeline_mode = #tpu.pipeline_mode<synchronous>, transform_indices = @transform_1, window_bounds = array<i64: 64, 10>}, {pipeline_mode = #tpu.pipeline_mode<synchronous>, transform_indices = @transform_2, window_bounds = array<i64: 64, 1>}, {pipeline_mode = #tpu.pipeline_mode<synchronous>, transform_indices = @transform_3, window_bounds = array<i64: 32, 64>}, {pipeline_mode = #tpu.pipeline_mode<synchronous>, transform_indices = @transform_4, window_bounds = array<i64: 32, 1>}, {pipeline_mode = #tpu.pipeline_mode<synchronous>, transform_indices = @transform_5, window_bounds = array<i64: 32, 1>}, {pipeline_mode = #tpu.pipeline_mode<synchronous>, transform_indices = @transform_6, window_bounds = array<i64: 1, 1>}, {transform_indices = @transform_7, window_bounds = array<i64: 1, 1, 8>}]} {
    %c0 = arith.constant 0 : index
    %c0_0 = arith.constant 0 : index
    %0 = vector.load %arg2[%c0, %c0_0] : memref<64x10xf32, #tpu.memory_space<vmem>>, vector<64x10xf32>
    %c0_1 = arith.constant 0 : index
    %c0_2 = arith.constant 0 : index
    %1 = vector.load %arg3[%c0_1, %c0_2] : memref<64x1xf32, #tpu.memory_space<vmem>>, vector<64x1xf32>
    %c0_3 = arith.constant 0 : index
    %c0_4 = arith.constant 0 : index
    %2 = vector.load %arg4[%c0_3, %c0_4] : memref<32x64xf32, #tpu.memory_space<vmem>>, vector<32x64xf32>
    %c0_5 = arith.constant 0 : index
    %c0_6 = arith.constant 0 : index
    %3 = vector.load %arg5[%c0_5, %c0_6] : memref<32x1xf32, #tpu.memory_space<vmem>>, vector<32x1xf32>
    %c0_7 = arith.constant 0 : index
    %c0_8 = arith.constant 0 : index
    %4 = vector.load %arg6[%c0_7, %c0_8] : memref<32x1xf32, #tpu.memory_space<vmem>>, vector<32x1xf32>
    %c0_9 = arith.constant 0 : index
    %c0_10 = arith.constant 0 : index
    %5 = vector.load %arg7[%c0_9, %c0_10] : memref<1x1xf32, #tpu.memory_space<vmem>>, vector<1x1xf32>
    %c0_i32 = arith.constant 0 : i32
    %c8_i32 = arith.constant 8 : i32
    %6 = arith.muli %c0_i32, %c8_i32 : i32
    %7 = tpu.assume_multiple %6, 8 : i32
    %8 = arith.index_cast %7 : i32 to index
    %c0_11 = arith.constant 0 : index
    %9 = vector.load %arg1[%8, %c0_11] : memref<8x10xf32, #tpu.memory_space<vmem>>, vector<8x10xf32>
    %cst = arith.constant dense<0.000000e+00> : vector<64x8xf32>
    %10 = tpu.matmul %0, %9, %cst {dimension_numbers = #tpu.dot_dimension_numbers<[1], [1], [0], [0], [0, 0, 1, 0], [], []>} : vector<64x10xf32>, vector<8x10xf32>, vector<64x8xf32> -> vector<64x8xf32>
    %11 = vector.broadcast %1 : vector<64x1xf32> to vector<64x8xf32>
    %12 = arith.addf %10, %11 : vector<64x8xf32>
    %cst_12 = arith.constant 0.000000e+00 : f32
    %13 = vector.broadcast %cst_12 : f32 to vector<64x8xf32>
    %14 = arith.cmpf ogt, %12, %13 : vector<64x8xf32>
    %cst_13 = arith.constant 2.000000e-01 : f32
    %15 = vector.broadcast %cst_13 : f32 to vector<64x8xf32>
    %16 = arith.mulf %15, %12 : vector<64x8xf32>
    %17 = arith.select %14, %12, %16 : vector<64x8xi1>, vector<64x8xf32>
    %cst_14 = arith.constant dense<0.000000e+00> : vector<32x8xf32>
    %18 = tpu.matmul %2, %17, %cst_14 {dimension_numbers = #tpu.dot_dimension_numbers<[1], [0], [0], [1], [0, 0, 1, 1], [], []>} : vector<32x64xf32>, vector<64x8xf32>, vector<32x8xf32> -> vector<32x8xf32>
    %19 = vector.broadcast %3 : vector<32x1xf32> to vector<32x8xf32>
    %20 = arith.addf %18, %19 : vector<32x8xf32>
    %cst_15 = arith.constant 0.000000e+00 : f32
    %21 = vector.broadcast %cst_15 : f32 to vector<32x8xf32>
    %22 = arith.cmpf ogt, %20, %21 : vector<32x8xf32>
    %cst_16 = arith.constant 2.000000e-01 : f32
    %23 = vector.broadcast %cst_16 : f32 to vector<32x8xf32>
    %24 = arith.mulf %23, %20 : vector<32x8xf32>
    %25 = arith.select %22, %20, %24 : vector<32x8xi1>, vector<32x8xf32>
    %26 = vector.broadcast %4 : vector<32x1xf32> to vector<32x8xf32>
    %27 = arith.mulf %25, %26 : vector<32x8xf32>
    %cst_17 = arith.constant dense<0.000000e+00> : vector<8xf32>
    %28 = vector.multi_reduction <add>, %27, %cst_17 [0] : vector<32x8xf32> to vector<8xf32>
    %29 = vector.shape_cast %28 : vector<8xf32> to vector<1x8xf32>
    %30 = vector.broadcast %5 : vector<1x1xf32> to vector<1x8xf32>
    %31 = arith.addf %29, %30 : vector<1x8xf32>
    %c0_18 = arith.constant 0 : index
    %32 = arith.index_cast %c0_i32 : i32 to index
    %c0_19 = arith.constant 0 : index
    %33 = vector.load %arg8[%c0_18, %32, %c0_19] : memref<1x1x8xf32, #tpu.memory_space<vmem>>, vector<1x1x8xf32>
    %34 = vector.shape_cast %33 : vector<1x1x8xf32> to vector<1x8xf32>
    %35 = vector.shape_cast %31 : vector<1x8xf32> to vector<1x1x8xf32>
    tpu.vector_store %arg8[%c0_18, %32, %c0_19], %35 {strides = array<i32>} : memref<1x1x8xf32, #tpu.memory_space<vmem>>, vector<1x1x8xf32>,
    %c1_i32 = arith.constant 1 : i32
    return
  }
  func.func @transform_0(%arg0: i32) -> (i32, i32) {
    %c0_i32 = arith.constant 0 : i32
    %c0_i32_0 = arith.constant 0 : i32
    return %arg0, %c0_i32 : i32, i32
  }
  func.func @transform_1(%arg0: i32) -> (i32, i32) {
    %c0_i32 = arith.constant 0 : i32
    %c0_i32_0 = arith.constant 0 : i32
    %c0_i32_1 = arith.constant 0 : i32
    return %c0_i32, %c0_i32_0 : i32, i32
  }
  func.func @transform_2(%arg0: i32) -> (i32, i32) {
    %c0_i32 = arith.constant 0 : i32
    %c0_i32_0 = arith.constant 0 : i32
    %c0_i32_1 = arith.constant 0 : i32
    return %c0_i32, %c0_i32_0 : i32, i32
  }
  func.func @transform_3(%arg0: i32) -> (i32, i32) {
    %c0_i32 = arith.constant 0 : i32
    %c0_i32_0 = arith.constant 0 : i32
    %c0_i32_1 = arith.constant 0 : i32
    return %c0_i32, %c0_i32_0 : i32, i32
  }
  func.func @transform_4(%arg0: i32) -> (i32, i32) {
    %c0_i32 = arith.constant 0 : i32
    %c0_i32_0 = arith.constant 0 : i32
    %c0_i32_1 = arith.constant 0 : i32
    return %c0_i32, %c0_i32_0 : i32, i32
  }
  func.func @transform_5(%arg0: i32) -> (i32, i32) {
    %c0_i32 = arith.constant 0 : i32
    %c0_i32_0 = arith.constant 0 : i32
    %c0_i32_1 = arith.constant 0 : i32
    return %c0_i32, %c0_i32_0 : i32, i32
  }
  func.func @transform_6(%arg0: i32) -> (i32, i32) {
    %c0_i32 = arith.constant 0 : i32
    %c0_i32_0 = arith.constant 0 : i32
    %c0_i32_1 = arith.constant 0 : i32
    return %c0_i32, %c0_i32_0 : i32, i32
  }
  func.func @transform_7(%arg0: i32) -> (i32, i32, i32) {
    %c0_i32 = arith.constant 0 : i32
    %c0_i32_0 = arith.constant 0 : i32
    %c0_i32_1 = arith.constant 0 : i32
    return %arg0, %c0_i32, %c0_i32_0 : i32, i32, i32
  }
}

</mosaic_0001>

<llo_original>
// kernel: probability_discriminator.1
$region0: #{probability_discriminator.1}
  #allocation0 [shape = 'u32[]', space=smem, size = 0x4, offset = 0x4, fixed_abs, tag = 'smem constant byte address 0x4 - core index']
  #allocation1 [shape = 'u32[72,128]{1,0:T(1,128)}', space=vmem, size = 0x9000, scoped, tag = 'internal scratch']
  #allocation2 [shape = 'f32[1,1]{1,0:T(1,128)S(1)}', space=vmem, size = 0x200, scoped, tag = 'scoped memory for probability_discriminator.1']
  %s0 = inlined_call_operand.vmem [shape: f32[8,10], index: 0, kind: input, shape index: {}]
  %s1 = inlined_call_operand.vmem [shape: f32[64,10], index: 1, kind: input, shape index: {}]
  %s2 = inlined_call_operand.vmem [shape: f32[64,1], index: 2, kind: input, shape index: {}]
  %s3 = inlined_call_operand.vmem [shape: f32[32,64], index: 3, kind: input, shape index: {}]
  %s4 = inlined_call_operand.vmem [shape: f32[32,1], index: 4, kind: input, shape index: {}]
  %s5 = inlined_call_operand.vmem [shape: f32[32,1], index: 5, kind: input, shape index: {}]
  %s6 = inlined_call_operand.<no memory space> [shape: f32[1,1], index: 6, kind: input, shape index: {}]
  %s7 = inlined_call_operand.hbm [shape: f32[1,1,8], index: 7, kind: output, shape index: {}]
  %s8 = sld [smem:[#allocation0]]
  $region38: #{probability_discriminator.1} parent=0
    _
  %s10 = ssub.s32 1, %s8
  %s11 = scalar_select 0, %s10, %s8
  %v12 = vstv %s6
  %13 = vst [vmem:[#allocation2] sm:$0x1] %v12
  $region1: #{probability_discriminator.1} parent=0
    #allocation3 [shape = 'u8[512]{0}', space=vmem, size = 0x400, scoped, tag = 'output window, operand 0, single buffered']
    #allocation4 [shape = 's32[1]{0}', space=sflag, size = 0x4, scoped, tag = 'scoped memory for probability_discriminator.1']
    %14 = vsyncpa [#allocation4], 0
    // Predicated region
    $region2: #{probability_discriminator.1} parent=1 // pred_check
      _
    $region3: #{probability_discriminator.1} parent=1 // pred_check_branch
      %16 = sbr.rel (0) target = $region5
    $region4: #{probability_discriminator.1} parent=1 // pred_region
      _
    $region5: #{probability_discriminator.1} parent=1 // pred_fallthru
      _
    // Predicated region
    $region6: #{probability_discriminator.1} parent=1 // pred_check
      _
    $region7: #{probability_discriminator.1} parent=1 // pred_check_branch
      %18 = sbr.rel (0) target = $region9
    $region8: #{probability_discriminator.1} parent=1 // pred_region
      _
    $region9: #{probability_discriminator.1} parent=1 // pred_fallthru
      _
    // Predicated region
    $region10: #{probability_discriminator.1} parent=1 // pred_check
      _
    $region11: #{probability_discriminator.1} parent=1 // pred_check_branch
      %20 = sbr.rel (0) target = $region13
    $region12: #{probability_discriminator.1} parent=1 // pred_region
      _
    $region13: #{probability_discriminator.1} parent=1 // pred_fallthru
      _
    // Predicated region
    $region14: #{probability_discriminator.1} parent=1 // pred_check
      _
    $region15: #{probability_discriminator.1} parent=1 // pred_check_branch
      %22 = sbr.rel (0) target = $region17
    $region16: #{probability_discriminator.1} parent=1 // pred_region
      _
    $region17: #{probability_discriminator.1} parent=1 // pred_fallthru
      _
    // Predicated region
    $region18: #{probability_discriminator.1} parent=1 // pred_check
      _
    $region19: #{probability_discriminator.1} parent=1 // pred_check_branch
      %24 = sbr.rel (0) target = $region21
    $region20: #{probability_discriminator.1} parent=1 // pred_region
      _
    $region21: #{probability_discriminator.1} parent=1 // pred_fallthru
      _
    // Predicated region
    $region22: #{probability_discriminator.1} parent=1 // pred_check
      _
    $region23: #{probability_discriminator.1} parent=1 // pred_check_branch
      %26 = sbr.rel (0) target = $region25
    $region24: #{probability_discriminator.1} parent=1 // pred_region
      _
    $region25: #{probability_discriminator.1} parent=1 // pred_fallthru
      _
    // Predicated region
    $region26: #{probability_discriminator.1} parent=1 // pred_check
      _
    $region27: #{probability_discriminator.1} parent=1 // pred_check_branch
      %28 = sbr.rel (0) target = $region29
    $region28: #{probability_discriminator.1} parent=1 // pred_region
      _
    $region29: #{probability_discriminator.1} parent=1 // pred_fallthru
      _
    %v29 = vld [vmem:[%s1] sm:$0xff]
    %v30 = vld [vmem:[%s1 + $0x8] sm:$0xff]
    %v31 = vld [vmem:[%s1 + $0x10] sm:$0xff]
    %v32 = vld [vmem:[%s1 + $0x18] sm:$0xff]
    %v33 = vld [vmem:[%s1 + $0x20] sm:$0xff]
    %v34 = vld [vmem:[%s1 + $0x28] sm:$0xff]
    %v35 = vld [vmem:[%s1 + $0x30] sm:$0xff]
    %v36 = vld [vmem:[%s1 + $0x38] sm:$0xff]
    %v37 = vld [vmem:[%s2] sm:$0xff]
    %v38 = vld [vmem:[%s2 + $0x8] sm:$0xff]
    %v39 = vld [vmem:[%s2 + $0x10] sm:$0xff]
    %v40 = vld [vmem:[%s2 + $0x18] sm:$0xff]
    %v41 = vld [vmem:[%s2 + $0x20] sm:$0xff]
    %v42 = vld [vmem:[%s2 + $0x28] sm:$0xff]
    %v43 = vld [vmem:[%s2 + $0x30] sm:$0xff]
    %v44 = vld [vmem:[%s2 + $0x38] sm:$0xff]
    %v45 = vld [vmem:[%s3] sm:$0xff]
    %v46 = vld [vmem:[%s3 + $0x8] sm:$0xff]
    %v47 = vld [vmem:[%s3 + $0x10] sm:$0xff]
    %v48 = vld [vmem:[%s3 + $0x18] sm:$0xff]
    %v49 = vld [vmem:[%s4] sm:$0xff]
    %v50 = vld [vmem:[%s4 + $0x8] sm:$0xff]
    %v51 = vld [vmem:[%s4 + $0x10] sm:$0xff]
    %v52 = vld [vmem:[%s4 + $0x18] sm:$0xff]
    %v53 = vld [vmem:[%s5] sm:$0xff]
    %v54 = vld [vmem:[%s5 + $0x8] sm:$0xff]
    %v55 = vld [vmem:[%s5 + $0x10] sm:$0xff]
    %v56 = vld [vmem:[%s5 + $0x18] sm:$0xff]
    %v57 = vld [vmem:[#allocation2] sm:$0x1]
    %v58 = vld [vmem:[%s0] sm:$0xff]
    %60 = vset.pattern.permute.xlu0 0
    %61 = vperm.xlu0 %60, %v37
    %v62 = vpop.permute.xlu0 %61
    %65 = vset.pattern.permute.xlu0 0
    %66 = vperm.xlu0 %65, %v38
    %v67 = vpop.permute.xlu0 %66
    %70 = vset.pattern.permute.xlu0 0
    %71 = vperm.xlu0 %70, %v39
    %v72 = vpop.permute.xlu0 %71
    %75 = vset.pattern.permute.xlu0 0
    %76 = vperm.xlu0 %75, %v40
    %v77 = vpop.permute.xlu0 %76
    %80 = vset.pattern.permute.xlu0 0
    %81 = vperm.xlu0 %80, %v41
    %v82 = vpop.permute.xlu0 %81
    %85 = vset.pattern.permute.xlu0 0
    %86 = vperm.xlu0 %85, %v42
    %v87 = vpop.permute.xlu0 %86
    %90 = vset.pattern.permute.xlu0 0
    %91 = vperm.xlu0 %90, %v43
    %v92 = vpop.permute.xlu0 %91
    %95 = vset.pattern.permute.xlu0 0
    %96 = vperm.xlu0 %95, %v44
    %v97 = vpop.permute.xlu0 %96
    %vm99 = vcmask 80896
    %v101 = vsel %vm99, %v29, 0
    %v104 = vsel %vm99, %v30, 0
    %v107 = vsel %vm99, %v31, 0
    %v110 = vsel %vm99, %v32, 0
    %v113 = vsel %vm99, %v33, 0
    %v116 = vsel %vm99, %v34, 0
    %v119 = vsel %vm99, %v35, 0
    %v122 = vsel %vm99, %v36, 0
    %v125 = vsel %vm99, %v58, 0
    %127 = vmatpush.xpose.msra.mxu0 0.0
    %128 = vmatpush.xpose.msra.mxu0 0.0
    %129 = vmatpush.xpose.msra.mxu0 0.0
    %130 = vmatpush.xpose.msra.mxu0 0.0
    %131 = vmatpush.xpose.msra.mxu0 0.0
    %132 = vmatpush.xpose.msra.mxu0 0.0
    %133 = vmatpush.xpose.msra.mxu0 0.0
    %134 = vmatpush.xpose.msra.mxu0 0.0
    %135 = vmatpush.xpose.msra.mxu0 0.0
    %136 = vmatpush.xpose.msra.mxu0 0.0
    %137 = vmatpush.xpose.msra.mxu0 0.0
    %138 = vmatpush.xpose.msra.mxu0 0.0
    %139 = vmatpush.xpose.msra.mxu0 0.0
    %140 = vmatpush.xpose.msra.mxu0 0.0
    %141 = vmatpush.xpose.msra.mxu0 0.0
    %142 = vmatpush.xpose.msra.mxu0 %v125
    %143 = vmatmul.f32.gmra.mxu0 %v101
    %v144 = vpop.f32.mrf.mxu0
    %v145 = vadd.f32 %v62, %v144
    %146 = vmatmul.f32.gmra.mxu0 %v104
    %v147 = vpop.f32.mrf.mxu0
    %v148 = vadd.f32 %v67, %v147
    %149 = vmatmul.f32.gmra.mxu0 %v107
    %v150 = vpop.f32.mrf.mxu0
    %v151 = vadd.f32 %v72, %v150
    %152 = vmatmul.f32.gmra.mxu0 %v110
    %v153 = vpop.f32.mrf.mxu0
    %v154 = vadd.f32 %v77, %v153
    %155 = vmatmul.f32.gmra.mxu0 %v113
    %v156 = vpop.f32.mrf.mxu0
    %v157 = vadd.f32 %v82, %v156
    %158 = vmatmul.f32.gmra.mxu0 %v116
    %v159 = vpop.f32.mrf.mxu0
    %v160 = vadd.f32 %v87, %v159
    %161 = vmatmul.f32.gmra.mxu0 %v119
    %v162 = vpop.f32.mrf.mxu0
    %v163 = vadd.f32 %v92, %v162
    %164 = vmatmul.f32.gmra.mxu0 %v122
    %v165 = vpop.f32.mrf.mxu0
    %v166 = vadd.f32 %v97, %v165
    %167 = vdwg.mxu0
    %vm168 = vcmp.gt.f32.partialorder %v145, 0.0
    %vm169 = vcmp.gt.f32.partialorder %v148, 0.0
    %vm170 = vcmp.gt.f32.partialorder %v151, 0.0
    %vm171 = vcmp.gt.f32.partialorder %v154, 0.0
    %vm172 = vcmp.gt.f32.partialorder %v157, 0.0
    %vm173 = vcmp.gt.f32.partialorder %v160, 0.0
    %vm174 = vcmp.gt.f32.partialorder %v163, 0.0
    %vm175 = vcmp.gt.f32.partialorder %v166, 0.0
    %v176 = vmul.f32 %v145, 0.2
    %v177 = vmul.f32 %v148, 0.2
    %v178 = vmul.f32 %v151, 0.2
    %v179 = vmul.f32 %v154, 0.2
    %v180 = vmul.f32 %v157, 0.2
    %v181 = vmul.f32 %v160, 0.2
    %v182 = vmul.f32 %v163, 0.2
    %v183 = vmul.f32 %v166, 0.2
    %v184 = vsel %vm168, %v145, %v176
    %v185 = vsel %vm169, %v148, %v177
    %v186 = vsel %vm170, %v151, %v178
    %v187 = vsel %vm171, %v154, %v179
    %v188 = vsel %vm172, %v157, %v180
    %v189 = vsel %vm173, %v160, %v181
    %v190 = vsel %vm174, %v163, %v182
    %v191 = vsel %vm175, %v166, %v183
    %193 = vset.pattern.permute.xlu0 0
    %194 = vperm.xlu0 %193, %v49
    %v195 = vpop.permute.xlu0 %194
    %198 = vset.pattern.permute.xlu0 0
    %199 = vperm.xlu0 %198, %v50
    %v200 = vpop.permute.xlu0 %199
    %203 = vset.pattern.permute.xlu0 0
    %204 = vperm.xlu0 %203, %v51
    %v205 = vpop.permute.xlu0 %204
    %208 = vset.pattern.permute.xlu0 0
    %209 = vperm.xlu0 %208, %v52
    %v210 = vpop.permute.xlu0 %209
    %vm212 = vcmask 523264
    %v214 = vsel %vm212, %v45, 0
    %v217 = vsel %vm212, %v46, 0
    %v220 = vsel %vm212, %v47, 0
    %v223 = vsel %vm212, %v48, 0
    %225 = vmatpush.msra.mxu0 0.0
    %226 = vmatpush.msra.mxu0 0.0
    %227 = vmatpush.msra.mxu0 0.0
    %228 = vmatpush.msra.mxu0 0.0
    %229 = vmatpush.msra.mxu0 0.0
    %230 = vmatpush.msra.mxu0 0.0
    %231 = vmatpush.msra.mxu0 0.0
    %232 = vmatpush.msra.mxu0 0.0
    %233 = vmatpush.msra.mxu0 %v191
    %234 = vmatpush.msra.mxu0 %v190
    %235 = vmatpush.msra.mxu0 %v189
    %236 = vmatpush.msra.mxu0 %v188
    %237 = vmatpush.msra.mxu0 %v187
    %238 = vmatpush.msra.mxu0 %v186
    %239 = vmatpush.msra.mxu0 %v185
    %240 = vmatpush.msra.mxu0 %v184
    %241 = vmatmul.f32.gmra.mxu0 %v214
    %v242 = vpop.f32.mrf.mxu0
    %v243 = vadd.f32 %v195, %v242
    %244 = vmatmul.f32.gmra.mxu0 %v217
    %v245 = vpop.f32.mrf.mxu0
    %v246 = vadd.f32 %v200, %v245
    %247 = vmatmul.f32.gmra.mxu0 %v220
    %v248 = vpop.f32.mrf.mxu0
    %v249 = vadd.f32 %v205, %v248
    %250 = vmatmul.f32.gmra.mxu0 %v223
    %v251 = vpop.f32.mrf.mxu0
    %v252 = vadd.f32 %v210, %v251
    %253 = vdwg.mxu0
    %vm254 = vcmp.gt.f32.partialorder %v243, 0.0
    %vm255 = vcmp.gt.f32.partialorder %v246, 0.0
    %vm256 = vcmp.gt.f32.partialorder %v249, 0.0
    %vm257 = vcmp.gt.f32.partialorder %v252, 0.0
    %v258 = vmul.f32 %v243, 0.2
    %v259 = vmul.f32 %v246, 0.2
    %v260 = vmul.f32 %v249, 0.2
    %v261 = vmul.f32 %v252, 0.2
    %v262 = vsel %vm254, %v243, %v258
    %v263 = vsel %vm255, %v246, %v259
    %v264 = vsel %vm256, %v249, %v260
    %v265 = vsel %vm257, %v252, %v261
    %267 = vset.pattern.permute.xlu0 0
    %268 = vperm.xlu0 %267, %v53
    %v269 = vpop.permute.xlu0 %268
    %272 = vset.pattern.permute.xlu0 0
    %273 = vperm.xlu0 %272, %v54
    %v274 = vpop.permute.xlu0 %273
    %277 = vset.pattern.permute.xlu0 0
    %278 = vperm.xlu0 %277, %v55
    %v279 = vpop.permute.xlu0 %278
    %282 = vset.pattern.permute.xlu0 0
    %283 = vperm.xlu0 %282, %v56
    %v284 = vpop.permute.xlu0 %283
    %v286 = vmul.f32 %v262, %v269
    %v287 = vmul.f32 %v263, %v274
    %v288 = vmul.f32 %v264, %v279
    %v289 = vmul.f32 %v265, %v284
    %vm290 = vcmask 64512
    %v291 = vsel %vm290, %v286, 0.0
    %v292 = vsel %vm290, %v287, 0.0
    %v293 = vadd.f32 %v291, %v292
    %v294 = vsel %vm290, %v288, 0.0
    %v295 = vadd.f32 %v293, %v294
    %v296 = vsel %vm290, %v289, 0.0
    %v297 = vadd.f32 %v295, %v296
    %v298 = vrot.slane %v297, 4
    %v299 = vadd.f32 %v297, %v298
    %v300 = vrot.slane %v299, 2
    %v301 = vadd.f32 %v299, %v300
    %v302 = vrot.slane %v301, 1
    %v303 = vadd.f32 %v301, %v302
    %305 = vset.pattern.permute.xlu0 0
    %306 = vperm.xlu0 %305, %v57
    %v307 = vpop.permute.xlu0 %306
    %v309 = vperm.slane %v307, 0
    %v310 = vadd.f32 %v303, %v309
    %vm311 = vcmask 57344
    %312 = vst.msk [vmem:[#allocation3] sm:$0x1] %vm311, %v310
    // Predicated region
    $region30: #{probability_discriminator.1} parent=1 // pred_check
      _
    $region31: #{probability_discriminator.1} parent=1 // pred_check_branch
      %314 = sbr.rel (0) target = $region33
    $region32: #{probability_discriminator.1} parent=1 // pred_region
      %316 = vsyncadd [#allocation4], 0
      %s318 = sshll.u32 [#allocation3], 4
      %s319 = int_to_ptr.vmem [resolvable:$true] %s318
      %s320 = sshll.u32 %s7, 4
      %s321 = int_to_ptr.hbm [resolvable:$true] %s320
      %323 = dma.vmem_to_hbm [thread:$0]  %s319, 16, %s321, [#allocation4]
    $region33: #{probability_discriminator.1} parent=1 // pred_fallthru
      _
    // Predicated region
    $region34: #{probability_discriminator.1} parent=1 // pred_check
      _
    $region35: #{probability_discriminator.1} parent=1 // pred_check_branch
      %325 = sbr.rel (0) target = $region37
    $region36: #{probability_discriminator.1} parent=1 // pred_region
      %327 = dma.done [#allocation4], 16
    $region37: #{probability_discriminator.1} parent=1 // pred_fallthru
      _
    %328 = vsyncpa [#allocation4], 1

</llo_original>
